<compile_context>
chip_gen: v5e
topology: v5e:2x2
jax: 0.10.0
libtpu: 0.0.40
codegen_flags: <defaults>
</compile_context>

<pallas_src>
import functools

import jax
import jax.numpy as jnp
from jax.experimental import pallas as pl
from jax.experimental.pallas import tpu as pltpu


def _sbm_criterion_kernel(pred_ref, label_ref, loss_ref, nll_acc, cs_acc, *, v_total):
    """pred_ref: [C, TV] logits (classes on sublanes, nodes on lanes), any float dtype.
    label_ref: [1, TV] int32; padded entries are -1 and contribute nothing.
    loss_ref:  [1, 1] f32 scalar output in SMEM.
    nll_acc / cs_acc: [C, 1] f32 VMEM accumulators persisting across the grid."""
    pid = pl.program_id(0)

    @pl.when(pid == 0)
    def _init():
        nll_acc[...] = jnp.zeros_like(nll_acc)
        cs_acc[...] = jnp.zeros_like(cs_acc)

    pred = pred_ref[...].astype(jnp.float32)   # [C, TV]  (bf16 input cast in-register)
    labels = label_ref[...]                    # [1, TV]
    C, TV = pred.shape

    # One-hot over the (short) class/sublane axis; padded lanes (label == -1) are all-zero,
    # so they drop out of both accumulators.
    class_ids = jax.lax.broadcasted_iota(jnp.int32, (C, TV), 0)
    onehot = (class_ids == labels).astype(jnp.float32)          # [C, TV]

    # Numerically stable per-node NLL; reductions are over the tiny class axis only.
    m = jnp.max(pred, axis=0, keepdims=True)                                # [1, TV]
    lse = jnp.log(jnp.sum(jnp.exp(pred - m), axis=0, keepdims=True)) + m    # [1, TV]
    picked = jnp.sum(pred * onehot, axis=0, keepdims=True)                  # [1, TV]
    nll = lse - picked                                                      # [1, TV]

    # Per-class partial sums for this tile (lane reduce -> [C, 1]).
    nll_acc[...] += jnp.sum(onehot * nll, axis=1, keepdims=True)
    cs_acc[...] += jnp.sum(onehot, axis=1, keepdims=True)

    @pl.when(pid == pl.num_programs(0) - 1)
    def _finalize():
        cs = cs_acc[...]                                        # [C, 1]
        v = jnp.float32(v_total)
        weight = (v - cs) / v * (cs > 0).astype(jnp.float32)    # class weights
        numer = jnp.sum(weight * nll_acc[...])                  # = sum_i w[y_i] * NLL_i
        denom = jnp.sum(weight * cs)                            # = sum_i w[y_i]
        loss_ref[0, 0] = numer / denom


def sbm_criterion(pred, label, num_classes, *, tile_v=4096):
    """pred: [V, num_classes] float logits (f32 or bf16); label: [V] int. Returns f32 loss."""
    V, C = pred.shape
    assert C == num_classes

    # Lane tile: multiple of 128, clamped to the (128-rounded) node count.
    tile_v = max(128, (tile_v // 128) * 128)
    v128 = ((V + 127) // 128) * 128
    tv = min(tile_v, v128)
    v_pad = ((V + tv - 1) // tv) * tv
    grid = (v_pad // tv,)

    # Lane-dense layout: classes on sublanes, nodes on lanes; keep original dtype (no upcast).
    pred_t = jnp.transpose(pred, (1, 0))                       # [C, V]
    pred_t = jnp.pad(pred_t, ((0, 0), (0, v_pad - V)))         # [C, v_pad]
    label_row = jnp.pad(label.astype(jnp.int32), (0, v_pad - V),
                        constant_values=-1).reshape(1, v_pad)  # [1, v_pad]

    kernel = functools.partial(_sbm_criterion_kernel, v_total=V)

    loss = pl.pallas_call(
        kernel,
        out_shape=jax.ShapeDtypeStruct((1, 1), jnp.float32),
        grid_spec=pltpu.PrefetchScalarGridSpec(
            num_scalar_prefetch=0,
            grid=grid,
            in_specs=[
                pl.BlockSpec((C, tv), lambda i: (0, i)),   # pred tile  [C, tv]
                pl.BlockSpec((1, tv), lambda i: (0, i)),   # label tile [1, tv]
            ],
            out_specs=pl.BlockSpec((1, 1), lambda i: (0, 0), memory_space=pltpu.SMEM),
            scratch_shapes=[
                pltpu.VMEM((C, 1), jnp.float32),   # per-class NLL sums
                pltpu.VMEM((C, 1), jnp.float32),   # per-class counts
            ],
        ),
        compiler_params=pltpu.CompilerParams(
            dimension_semantics=("arbitrary",),        # node axis is a reduction
            vmem_limit_bytes=32 * 1024 * 1024,
        ),
    )(pred_t, label_row)
    return loss[0, 0]


def _reference(pred, label, num_classes):
    """Pure-JAX reference mirroring the PyTorch module."""
    V = pred.shape[0]
    cluster_sizes = jnp.bincount(label, length=num_classes).astype(jnp.float32)
    weight = (V - cluster_sizes) / V * (cluster_sizes > 0).astype(jnp.float32)
    logp = jax.nn.log_softmax(pred.astype(jnp.float32), axis=-1)
    nll = -jnp.take_along_axis(logp, label[:, None], axis=1)[:, 0]
    w = weight[label]
    return jnp.sum(w * nll) / jnp.sum(w)


if __name__ == "__main__":
    key = jax.random.PRNGKey(0)
    V, num_classes = 300, 6
    k1, k2 = jax.random.split(key)
    pred = jax.random.normal(k1, (V, num_classes), dtype=jnp.float32)
    label = jax.random.randint(k2, (V,), 0, num_classes, dtype=jnp.int32)

    # Multi-tile path (grid > 1, includes padded lanes).
    loss_tiled = sbm_criterion(pred, label, num_classes, tile_v=128)
    # Default tiling (single tile for this small V).
    loss = sbm_criterion(pred, label, num_classes)
    jax.block_until_ready((loss, loss_tiled))

    ref = _reference(pred, label, num_classes)
    assert jnp.allclose(loss, ref, rtol=1e-4, atol=1e-4), (loss, ref)
    assert jnp.allclose(loss_tiled, ref, rtol=1e-4, atol=1e-4), (loss_tiled, ref)

    # bf16 logits: no wrapper-side upcast; kernel casts in-register.
    pred_bf16 = pred.astype(jnp.bfloat16)
    loss_bf16 = sbm_criterion(pred_bf16, label, num_classes, tile_v=128)
    jax.block_until_ready(loss_bf16)
    ref_bf16 = _reference(pred_bf16.astype(jnp.float32), label, num_classes)
    assert jnp.allclose(loss_bf16, ref_bf16, rtol=1e-3, atol=1e-3), (loss_bf16, ref_bf16)

    print("KERNEL_OK")
</pallas_src>

<mosaic_0001>
module attributes {stable_mosaic.version = 11 : i64} {
  func.func @_sbm_criterion_kernel(%arg0: i32, %arg1: memref<6x128xf32, #tpu.memory_space<vmem>>, %arg2: memref<1x128xi32, #tpu.memory_space<vmem>>, %arg3: memref<1x1xf32, #tpu.memory_space<smem>>, %arg4: memref<6x1xf32, #tpu.memory_space<vmem>>, %arg5: memref<6x1xf32, #tpu.memory_space<vmem>>) attributes {dimension_semantics = [#tpu.dimension_semantics<arbitrary>], iteration_bounds = array<i64: 3>, scalar_prefetch = 0 : i64, scratch_operands = 2 : i64, tpu.core_type = #tpu.core_type<tc>, window_params = [{transform_indices = @transform_0, window_bounds = array<i64: 6, 128>}, {transform_indices = @transform_1, window_bounds = array<i64: 1, 128>}, {transform_indices = @transform_2, window_bounds = array<i64: 1, 1>}]} {
    %c0_i32 = arith.constant 0 : i32
    %0 = arith.cmpi eq, %arg0, %c0_i32 : i32
    %1 = arith.extui %0 : i1 to i32
    %c0_i32_0 = arith.constant 0 : i32
    %2 = arith.cmpi ne, %1, %c0_i32_0 : i32
    scf.if %2 {
      %cst_17 = arith.constant 0.000000e+00 : f32
      %38 = vector.broadcast %cst_17 : f32 to vector<6x1xf32>
      %c0_18 = arith.constant 0 : index
      %c0_19 = arith.constant 0 : index
      %39 = vector.load %arg4[%c0_18, %c0_19] : memref<6x1xf32, #tpu.memory_space<vmem>>, vector<6x1xf32>
      tpu.vector_store %arg4[%c0_18, %c0_19], %38 {strides = array<i32>} : memref<6x1xf32, #tpu.memory_space<vmem>>, vector<6x1xf32>,
      %cst_20 = arith.constant 0.000000e+00 : f32
      %40 = vector.broadcast %cst_20 : f32 to vector<6x1xf32>
      %c0_21 = arith.constant 0 : index
      %c0_22 = arith.constant 0 : index
      %41 = vector.load %arg5[%c0_21, %c0_22] : memref<6x1xf32, #tpu.memory_space<vmem>>, vector<6x1xf32>
      tpu.vector_store %arg5[%c0_21, %c0_22], %40 {strides = array<i32>} : memref<6x1xf32, #tpu.memory_space<vmem>>, vector<6x1xf32>,
    } else {
    }
    %c0 = arith.constant 0 : index
    %c0_1 = arith.constant 0 : index
    %3 = vector.load %arg1[%c0, %c0_1] : memref<6x128xf32, #tpu.memory_space<vmem>>, vector<6x128xf32>
    %c0_2 = arith.constant 0 : index
    %c0_3 = arith.constant 0 : index
    %4 = vector.load %arg2[%c0_2, %c0_3] : memref<1x128xi32, #tpu.memory_space<vmem>>, vector<1x128xi32>
    %5 = tpu.iota {dimensions = array<i32: 0>} : vector<6x128xi32>
    %6 = vector.broadcast %4 : vector<1x128xi32> to vector<6x128xi32>
    %7 = arith.cmpi eq, %5, %6 : vector<6x128xi32>
    %8 = arith.extui %7 : vector<6x128xi1> to vector<6x128xi32>
    %9 = arith.sitofp %8 : vector<6x128xi32> to vector<6x128xf32>
    %cst = arith.constant dense<0xFF800000> : vector<128xf32>
    %10 = vector.multi_reduction <maximumf>, %3, %cst [0] : vector<6x128xf32> to vector<128xf32>
    %11 = vector.shape_cast %10 : vector<128xf32> to vector<1x128xf32>
    %12 = vector.broadcast %11 : vector<1x128xf32> to vector<6x128xf32>
    %13 = arith.subf %3, %12 : vector<6x128xf32>
    %14 = math.exp %13 : vector<6x128xf32>
    %cst_4 = arith.constant dense<0.000000e+00> : vector<128xf32>
    %15 = vector.multi_reduction <add>, %14, %cst_4 [0] : vector<6x128xf32> to vector<128xf32>
    %16 = vector.shape_cast %15 : vector<128xf32> to vector<1x128xf32>
    %17 = math.log %16 : vector<1x128xf32>
    %18 = arith.addf %17, %11 : vector<1x128xf32>
    %19 = arith.mulf %3, %9 : vector<6x128xf32>
    %cst_5 = arith.constant dense<0.000000e+00> : vector<128xf32>
    %20 = vector.multi_reduction <add>, %19, %cst_5 [0] : vector<6x128xf32> to vector<128xf32>
    %21 = vector.shape_cast %20 : vector<128xf32> to vector<1x128xf32>
    %22 = arith.subf %18, %21 : vector<1x128xf32>
    %c0_6 = arith.constant 0 : index
    %c0_7 = arith.constant 0 : index
    %23 = vector.load %arg4[%c0_6, %c0_7] : memref<6x1xf32, #tpu.memory_space<vmem>>, vector<6x1xf32>
    %24 = vector.broadcast %22 : vector<1x128xf32> to vector<6x128xf32>
    %25 = arith.mulf %9, %24 : vector<6x128xf32>
    %cst_8 = arith.constant dense<0.000000e+00> : vector<6xf32>
    %26 = vector.multi_reduction <add>, %25, %cst_8 [1] : vector<6x128xf32> to vector<6xf32>
    %27 = vector.shape_cast %26 : vector<6xf32> to vector<6x1xf32>
    %28 = arith.addf %23, %27 : vector<6x1xf32>
    %c0_9 = arith.constant 0 : index
    %c0_10 = arith.constant 0 : index
    %29 = vector.load %arg4[%c0_9, %c0_10] : memref<6x1xf32, #tpu.memory_space<vmem>>, vector<6x1xf32>
    tpu.vector_store %arg4[%c0_9, %c0_10], %28 {strides = array<i32>} : memref<6x1xf32, #tpu.memory_space<vmem>>, vector<6x1xf32>,
    %c0_11 = arith.constant 0 : index
    %c0_12 = arith.constant 0 : index
    %30 = vector.load %arg5[%c0_11, %c0_12] : memref<6x1xf32, #tpu.memory_space<vmem>>, vector<6x1xf32>
    %cst_13 = arith.constant dense<0.000000e+00> : vector<6xf32>
    %31 = vector.multi_reduction <add>, %9, %cst_13 [1] : vector<6x128xf32> to vector<6xf32>
    %32 = vector.shape_cast %31 : vector<6xf32> to vector<6x1xf32>
    %33 = arith.addf %30, %32 : vector<6x1xf32>
    %c0_14 = arith.constant 0 : index
    %c0_15 = arith.constant 0 : index
    %34 = vector.load %arg5[%c0_14, %c0_15] : memref<6x1xf32, #tpu.memory_space<vmem>>, vector<6x1xf32>
    tpu.vector_store %arg5[%c0_14, %c0_15], %33 {strides = array<i32>} : memref<6x1xf32, #tpu.memory_space<vmem>>, vector<6x1xf32>,
    %c2_i32 = arith.constant 2 : i32
    %35 = arith.cmpi eq, %arg0, %c2_i32 : i32
    %36 = arith.extui %35 : i1 to i32
    %c0_i32_16 = arith.constant 0 : i32
    %37 = arith.cmpi ne, %36, %c0_i32_16 : i32
    scf.if %37 {
      %c0_17 = arith.constant 0 : index
      %c0_18 = arith.constant 0 : index
      %38 = vector.load %arg5[%c0_17, %c0_18] : memref<6x1xf32, #tpu.memory_space<vmem>>, vector<6x1xf32>
      %cst_19 = arith.constant 3.000000e+02 : f32
      %39 = vector.broadcast %cst_19 : f32 to vector<6x1xf32>
      %40 = arith.subf %39, %38 : vector<6x1xf32>
      %cst_20 = arith.constant 3.000000e+02 : f32
      %41 = vector.broadcast %cst_20 : f32 to vector<6x1xf32>
      %42 = arith.divf %40, %41 : vector<6x1xf32>
      %cst_21 = arith.constant 0.000000e+00 : f32
      %43 = vector.broadcast %cst_21 : f32 to vector<6x1xf32>
      %44 = arith.cmpf ogt, %38, %43 : vector<6x1xf32>
      %45 = arith.extui %44 : vector<6x1xi1> to vector<6x1xi32>
      %46 = arith.sitofp %45 : vector<6x1xi32> to vector<6x1xf32>
      %47 = arith.mulf %42, %46 : vector<6x1xf32>
      %c0_22 = arith.constant 0 : index
      %c0_23 = arith.constant 0 : index
      %48 = vector.load %arg4[%c0_22, %c0_23] : memref<6x1xf32, #tpu.memory_space<vmem>>, vector<6x1xf32>
      %49 = arith.mulf %47, %48 : vector<6x1xf32>
      %50 = vector.shape_cast %49 : vector<6x1xf32> to vector<1x6x1xf32>
      %cst_24 = arith.constant dense<0.000000e+00> : vector<1xf32>
      %51 = vector.multi_reduction <add>, %50, %cst_24 [1, 2] : vector<1x6x1xf32> to vector<1xf32>
      %52 = vector.shape_cast %51 : vector<1xf32> to vector<1x1x1xf32>
      %53 = vector.extract %52[0, 0, 0] : f32 from vector<1x1x1xf32>
      %54 = arith.mulf %47, %38 : vector<6x1xf32>
      %55 = vector.shape_cast %54 : vector<6x1xf32> to vector<1x6x1xf32>
      %cst_25 = arith.constant dense<0.000000e+00> : vector<1xf32>
      %56 = vector.multi_reduction <add>, %55, %cst_25 [1, 2] : vector<1x6x1xf32> to vector<1xf32>
      %57 = vector.shape_cast %56 : vector<1xf32> to vector<1x1x1xf32>
      %58 = vector.extract %57[0, 0, 0] : f32 from vector<1x1x1xf32>
      %59 = arith.divf %53, %58 : f32
      %c0_26 = arith.constant 0 : index
      %c0_27 = arith.constant 0 : index
      %60 = memref.load %arg3[%c0_26, %c0_27] : memref<1x1xf32, #tpu.memory_space<smem>>
      memref.store %59, %arg3[%c0_26, %c0_27] : memref<1x1xf32, #tpu.memory_space<smem>>
    } else {
    }
    return
  }
  func.func @transform_0(%arg0: i32) -> (i32, i32) {
    %c0_i32 = arith.constant 0 : i32
    %c0_i32_0 = arith.constant 0 : i32
    return %c0_i32, %arg0 : i32, i32
  }
  func.func @transform_1(%arg0: i32) -> (i32, i32) {
    %c0_i32 = arith.constant 0 : i32
    %c0_i32_0 = arith.constant 0 : i32
    return %c0_i32, %arg0 : i32, i32
  }
  func.func @transform_2(%arg0: i32) -> (i32, i32) {
    %c0_i32 = arith.constant 0 : i32
    %c0_i32_0 = arith.constant 0 : i32
    %c0_i32_1 = arith.constant 0 : i32
    return %c0_i32, %c0_i32_0 : i32, i32
  }
}

</mosaic_0001>

<llo_original>
// kernel: tpu_custom_call.1
$region0: #{tpu_custom_call.1}
  #allocation0 [shape = 'u32[]', space=smem, size = 0x4, offset = 0x4, fixed_abs, tag = 'smem constant byte address 0x4 - core index']
  #allocation1 [shape = 'u32[72,128]{1,0:T(1,128)}', space=vmem, size = 0x9000, scoped, tag = 'internal scratch']
  #allocation2 [shape = 'f32[6,1]{1,0:T(8,128)}', space=vmem, size = 0x1000, scoped, tag = 'scratch operand']
  #allocation3 [shape = 'f32[6,1]{1,0:T(8,128)}', space=vmem, size = 0x1000, scoped, tag = 'scratch operand']
  %s0 = inlined_call_operand.hbm [shape: f32[6,384], index: 0, kind: input, shape index: {}]
  %s1 = inlined_call_operand.hbm [shape: s32[1,384], index: 1, kind: input, shape index: {}]
  %s2 = inlined_call_operand.hbm [shape: f32[1,1], index: 2, kind: output, shape index: {}]
  %s3 = sld [smem:[#allocation0]]
  $region57: #{tpu_custom_call.1} parent=0
    _
  %s5 = ssub.s32 1, %s3
  %s6 = scalar_select 0, %s5, %s3
  $region1: #{tpu_custom_call.1} parent=0
    #allocation4 [shape = 'u8[8192]{0}', space=vmem, size = 0x2000, scoped, tag = 'input window, operand 0']
    #allocation5 [shape = 's32[2]{0}', space=sflag, size = 0x8, scoped, tag = 'scoped memory for tpu_custom_call.1']
    #allocation6 [shape = 's32[2]{0}', space=sflag, size = 0x8, scoped, tag = 'scoped memory for tpu_custom_call.1']
    #allocation7 [shape = 'u8[1024]{0}', space=vmem, size = 0x400, scoped, tag = 'input window, operand 1']
    #allocation8 [shape = 's32[2]{0}', space=sflag, size = 0x8, scoped, tag = 'scoped memory for tpu_custom_call.1']
    #allocation9 [shape = 'u8[512]{0}', space=smem, size = 0x200, scoped, tag = 'output window, operand 0, single buffered']
    %7 = vsyncpa [#allocation5], 0
    %s8 = scalar_lea.sflag [#allocation5], 1
    %9 = vsyncpa %s8, 0
    %10 = vsyncpa [#allocation8], 0
    %s11 = scalar_lea.sflag [#allocation8], 1
    %12 = vsyncpa %s11, 0
    %13 = vsyncpa [#allocation6], 0
    loop: start=0, step=1, limit=5
    $region2: #{tpu_custom_call.1} parent=1 // loop_pre_header
      _
    $region3: #{tpu_custom_call.1} parent=1 // loop_header
      %s15 = sphi 0, %s19
      %p16 = scmp.ge.s32.totalorder %s15, 5
      %s25 = sphi 0, %s27
      %s28 = sphi 0, %s25
      %s29 = sphi 0, %s28
      %s45 = sphi 0, %s29
      %s51 = sphi 0, %s53
      %s54 = sphi 0, %s51
      %s55 = sphi 0, %s54
      %s71 = sphi 0, %s55
      %s75 = sphi 0, %s75
      %s77 = sphi 0, %s75
      %s78 = sphi 0, %s77
      %s92 = sphi 0, %s78
    $region4: #{tpu_custom_call.1} parent=1 // loop_header_branch
      %18 = sbr.rel (%p16) target = $region8
    $region5: #{tpu_custom_call.1} parent=1 // loop_body
      %s20 = ssub.s32 %s15, 1
      %s21 = ssub.s32 %s15, 2
      %s22 = sadd.s32 %s15, 1
      %s23 = ssub.s32 %s15, %s22
      %p24 = scmp.eq.s32.totalorder %s23, 0
      %s26 = sadd.s32 %s25, 1
      %s27 = scalar_select %p24, %s25, %s26
      %p30 = pneg %p24
      %p31 = scmp.eq.s32.totalorder %s15, 2
      %p32 = por %p30, %p31
      %p33 = scmp.ne.s32.totalorder %s25, %s28
      %p34 = scmp.eq.s32.totalorder %s15, 0
      %p35 = por %p33, %p34
      %p36 = scmp.ne.s32.totalorder %s25, %s28
      %p37 = scmp.eq.s32.totalorder %s20, 2
      %p38 = por %p36, %p37
      %p39 = scmp.ne.s32.totalorder %s28, %s29
      %p40 = scmp.eq.s32.totalorder %s20, 0
      %p41 = por %p39, %p40
      %p42 = scmp.ne.s32.totalorder %s28, %s29
      %p43 = scmp.eq.s32.totalorder %s21, 2
      %p44 = por %p42, %p43
      %p46 = scmp.ne.s32.totalorder %s29, %s45
      %p47 = scmp.eq.s32.totalorder %s21, 0
      %p48 = por %p46, %p47
      %s49 = ssub.s32 %s15, %s22
      %p50 = scmp.eq.s32.totalorder %s49, 0
      %s52 = sadd.s32 %s51, 1
      %s53 = scalar_select %p50, %s51, %s52
      %p56 = pneg %p50
      %p57 = scmp.eq.s32.totalorder %s15, 2
      %p58 = por %p56, %p57
      %p59 = scmp.ne.s32.totalorder %s51, %s54
      %p60 = scmp.eq.s32.totalorder %s15, 0
      %p61 = por %p59, %p60
      %p62 = scmp.ne.s32.totalorder %s51, %s54
      %p63 = scmp.eq.s32.totalorder %s20, 2
      %p64 = por %p62, %p63
      %p65 = scmp.ne.s32.totalorder %s54, %s55
      %p66 = scmp.eq.s32.totalorder %s20, 0
      %p67 = por %p65, %p66
      %p68 = scmp.ne.s32.totalorder %s54, %s55
      %p69 = scmp.eq.s32.totalorder %s21, 2
      %p70 = por %p68, %p69
      %p72 = scmp.ne.s32.totalorder %s55, %s71
      %p73 = scmp.eq.s32.totalorder %s21, 0
      %p74 = por %p72, %p73
      %s76 = sadd.s32 %s75, 1
      %p79 = scmp.eq.s32.totalorder %s15, 2
      %p80 = scmp.ne.s32.totalorder %s75, %s77
      %p81 = scmp.eq.s32.totalorder %s15, 0
      %p82 = por %p80, %p81
      %p83 = scmp.ne.s32.totalorder %s75, %s77
      %p84 = scmp.eq.s32.totalorder %s20, 2
      %p85 = por %p83, %p84
      %p86 = scmp.ne.s32.totalorder %s77, %s78
      %p87 = scmp.eq.s32.totalorder %s20, 0
      %p88 = por %p86, %p87
      %p89 = scmp.ne.s32.totalorder %s77, %s78
      %p90 = scmp.eq.s32.totalorder %s21, 2
      %p91 = por %p89, %p90
      %p93 = scmp.ne.s32.totalorder %s78, %s92
      %p94 = scmp.eq.s32.totalorder %s21, 0
      %p95 = por %p93, %p94
      %p96 = scmp.le.s32.totalorder 1, %s15
      %p97 = scmp.lt.s32.totalorder %s15, 4
      %p98 = pnand %p96, %p97
      %p99 = pneg %p98
      // Predicated region
      $region9: #{tpu_custom_call.1} parent=5 // pred_check
        _
      $region10: #{tpu_custom_call.1} parent=5 // pred_check_branch
        %101 = sbr.rel (%p98) target = $region12
      $region11: #{tpu_custom_call.1} parent=5 // pred_region
        %s102 = ssub.s32 %s15, 1
      $region12: #{tpu_custom_call.1} parent=5 // pred_fallthru
        _
      %p103 = scmp.lt.s32.totalorder %s15, 3
      // Predicated region
      $region13: #{tpu_custom_call.1} parent=5 // pred_check
        %p104 = pneg %p103
      $region14: #{tpu_custom_call.1} parent=5 // pred_check_branch
        %106 = sbr.rel (%p104) target = $region16
      $region15: #{tpu_custom_call.1} parent=5 // pred_region
        // Predicated region
        $region17: #{tpu_custom_call.1} parent=15 // pred_check
          %p107 = pneg %p35
        $region18: #{tpu_custom_call.1} parent=15 // pred_check_branch
          %109 = sbr.rel (%p107) target = $region20
        $region19: #{tpu_custom_call.1} parent=15 // pred_region
          %s110 = sand.u32 %s25, 1
          %s111 = scalar_lea.sflag [#allocation5], %s110
          %s112 = sand.u32 %s25, 1
          %s113 = smul.addr %s112, 8
          %s114 = scalar_lea.vmem [#allocation4], %s113
          %116 = vsyncadd %s111, 0
          %s117 = smul.addr %s15, 8
          %s118 = scalar_lea.hbm %s0, %s117
          %s120 = sshll.u32 %s118, 4
          %s121 = int_to_ptr.hbm [resolvable:$true] %s120
          %s122 = sshll.u32 %s114, 4
          %s123 = int_to_ptr.vmem [resolvable:$true] %s122
          %125 = dma.hbm_to_vmem [thread:$0]  %s121, 128, %s123, %s111
        $region20: #{tpu_custom_call.1} parent=15 // pred_fallthru
          _
        // Predicated region
        $region21: #{tpu_custom_call.1} parent=15 // pred_check
          %p126 = pneg %p61
        $region22: #{tpu_custom_call.1} parent=15 // pred_check_branch
          %128 = sbr.rel (%p126) target = $region24
        $region23: #{tpu_custom_call.1} parent=15 // pred_region
          %s129 = sand.u32 %s51, 1
          %s130 = scalar_lea.sflag [#allocation8], %s129
          %s131 = sand.u32 %s51, 1
          %s132 = scalar_lea.vmem [#allocation7], %s131
          %134 = vsyncadd %s130, 0
          %s135 = scalar_lea.hbm %s1, %s15
          %s137 = sshll.u32 %s135, 4
          %s138 = int_to_ptr.hbm [resolvable:$true] %s137
          %s139 = sshll.u32 %s132, 4
          %s140 = int_to_ptr.vmem [resolvable:$true] %s139
          %142 = dma.hbm_to_vmem [thread:$0]  %s138, 16, %s140, %s130
        $region24: #{tpu_custom_call.1} parent=15 // pred_fallthru
          _
      $region16: #{tpu_custom_call.1} parent=5 // pred_fallthru
        _
      %p143 = scmp.le.s32.totalorder 1, %s15
      %p144 = scmp.lt.s32.totalorder %s15, 4
      %p145 = pnand %p143, %p144
      %p146 = pneg %p145
      // Predicated region
      $region25: #{tpu_custom_call.1} parent=5 // pred_check
        _
      $region26: #{tpu_custom_call.1} parent=5 // pred_check_branch
        %148 = sbr.rel (%p145) target = $region28
      $region27: #{tpu_custom_call.1} parent=5 // pred_region
        %s149 = ssub.s32 %s15, 1
        %s150 = sand.u32 %s28, 1
        %s151 = scalar_lea.sflag [#allocation5], %s150
        %s152 = sand.u32 %s28, 1
        %s153 = smul.addr %s152, 8
        %s154 = scalar_lea.vmem [#allocation4], %s153
        // Predicated region
        $region29: #{tpu_custom_call.1} parent=27 // pred_check
          %p155 = pneg %p41
        $region30: #{tpu_custom_call.1} parent=27 // pred_check_branch
          %157 = sbr.rel (%p155) target = $region32
        $region31: #{tpu_custom_call.1} parent=27 // pred_region
          %159 = dma.done %s151, 128
        $region32: #{tpu_custom_call.1} parent=27 // pred_fallthru
          _
        %s160 = sand.u32 %s54, 1
        %s161 = scalar_lea.sflag [#allocation8], %s160
        %s162 = sand.u32 %s54, 1
        %s163 = scalar_lea.vmem [#allocation7], %s162
        // Predicated region
        $region33: #{tpu_custom_call.1} parent=27 // pred_check
          %p164 = pneg %p67
        $region34: #{tpu_custom_call.1} parent=27 // pred_check_branch
          %166 = sbr.rel (%p164) target = $region36
        $region35: #{tpu_custom_call.1} parent=27 // pred_region
          %168 = dma.done %s161, 16
        $region36: #{tpu_custom_call.1} parent=27 // pred_fallthru
          _
        %s169 = sand.u32 %s28, 1
        %s170 = scalar_lea.sflag [#allocation5], %s169
        %s171 = sand.u32 %s28, 1
        %s172 = smul.addr %s171, 8
        %s173 = scalar_lea.vmem [#allocation4], %s172
        %p174 = pneg %p41
        %p175 = pneg %p38
        %s176 = sand.u32 %s54, 1
        %s177 = scalar_lea.sflag [#allocation8], %s176
        %s178 = sand.u32 %s54, 1
        %s179 = scalar_lea.vmem [#allocation7], %s178
        %p180 = pneg %p67
        %p181 = pneg %p64
        %p182 = pneg %p88
        %p183 = pneg %p85
        %p184 = scmp.eq.s32.totalorder %s20, 0
        // Predicated region
        $region37: #{tpu_custom_call.1} parent=27 // pred_check
          %p185 = pneg %p184
        $region38: #{tpu_custom_call.1} parent=27 // pred_check_branch
          %187 = sbr.rel (%p185) target = $region40
        $region39: #{tpu_custom_call.1} parent=27 // pred_region
          %vm188 = vcmask 5120
          %189 = vst.msk [vmem:[#allocation2] sm:$0x3f] %vm188, 0.0
          %190 = vst.msk [vmem:[#allocation3] sm:$0x3f] %vm188, 0.0
        $region40: #{tpu_custom_call.1} parent=27 // pred_fallthru
          _
        %v191 = vld [vmem:[%s154] sm:$0x3f]
        %v192 = vld [vmem:[%s163] sm:$0x1]
        %v193 = vlaneseq
        %v194 = vshrl.u32 %v193, 7
        %v195 = vperm.slane %v192, 0
        %vm196 = vcmp.eq.s32.totalorder %v194, %v195
        %v197 = vsel %vm196, 1, 0
        %v198 = vcvt.s32.f32 %v197
        %vm199 = vcmask 1045504
        %v200 = vsel %vm199, %v191, -inf
        %v201 = vrot.slane %v200, 4
        %v202 = vmax.f32 %v200, %v201
        %v203 = vrot.slane %v202, 2
        %v204 = vmax.f32 %v202, %v203
        %v205 = vrot.slane %v204, 1
        %v206 = vmax.f32 %v204, %v205
        %v207 = vsub.f32 %v191, %v206
        %v208 = vmul.f32 %v207, 1.442695
        %v209 = vpow.pop %v208
        %v210 = vsel %vm199, %v209, 0.0
        %v211 = vrot.slane %v210, 4
        %v212 = vadd.f32 %v210, %v211
        %v213 = vrot.slane %v212, 2
        %v214 = vadd.f32 %v212, %v213
        %v215 = vrot.slane %v214, 1
        %v216 = vadd.f32 %v214, %v215
        %v217 = vlog2.pop %v216
        %v218 = vmul.f32 %v217, 0.6931472
        %v219 = vadd.f32 %v218, %v206
        %v220 = vmul.f32 %v191, %v198
        %v221 = vsel %vm199, %v220, 0.0
        %v222 = vrot.slane %v221, 4
        %v223 = vadd.f32 %v221, %v222
        %v224 = vrot.slane %v223, 2
        %v225 = vadd.f32 %v223, %v224
        %v226 = vrot.slane %v225, 1
        %v227 = vadd.f32 %v225, %v226
        %v228 = vsub.f32 %v219, %v227
        %v229 = vld [vmem:[#allocation2] sm:$0x3f]
        %v230 = vmul.f32 %v198, %v228
        %v231 = vsel %vm199, %v230, 0.0
        %232 = vadd.xlane.f32.xlu0 %v231
        %v233 = vpop.xlane.xlu0 %232
        %v234 = vadd.f32 %v229, %v233
        %vm235 = vcmask 5120
        %236 = vst.msk [vmem:[#allocation2] sm:$0x3f] %vm235, %v234
        %v237 = vld [vmem:[#allocation3] sm:$0x3f]
        %v238 = vsel %vm199, %v198, 0.0
        %239 = vadd.xlane.f32.xlu0 %v238
        %v240 = vpop.xlane.xlu0 %239
        %v241 = vadd.f32 %v237, %v240
        %242 = vst.msk [vmem:[#allocation3] sm:$0x3f] %vm235, %v241
        %p243 = scmp.eq.s32.totalorder %s20, 2
        // Predicated region
        $region41: #{tpu_custom_call.1} parent=27 // pred_check
          %p244 = pneg %p243
        $region42: #{tpu_custom_call.1} parent=27 // pred_check_branch
          %246 = sbr.rel (%p244) target = $region44
        $region43: #{tpu_custom_call.1} parent=27 // pred_region
          %v247 = vld [vmem:[#allocation3] sm:$0x3f]
          %v248 = vsub.f32 300.0, %v247
          %v249 = vrcp.pop 300.0
          %v250 = vmul.f32 300.0, %v249
          %v251 = vsub.f32 1.0, %v250
          %v252 = vmul.f32 %v249, %v251
          %v253 = vadd.f32 %v249, %v252
          %vm254 = vweird.f32 %v249
          %v255 = vsel %vm254, %v249, %v253
          %v256 = vmul.f32 %v248, %v255
          %vm257 = vcmp.gt.f32.partialorder %v247, 0.0
          %v258 = vsel %vm257, 1, 0
          %v259 = vcvt.s32.f32 %v258
          %v260 = vmul.f32 %v256, %v259
          %v261 = vld [vmem:[#allocation2] sm:$0x3f]
          %v262 = vmul.f32 %v260, %v261
          %v263 = vsel %vm235, %v262, 0.0
          %264 = vadd.xlane.f32.xlu0 %v263
          %v265 = vpop.xlane.xlu0 %264
          %v266 = vrot.slane %v265, 4
          %v267 = vadd.f32 %v265, %v266
          %v268 = vrot.slane %v267, 2
          %v269 = vadd.f32 %v267, %v268
          %v270 = vrot.slane %v269, 1
          %v271 = vadd.f32 %v269, %v270
          %s272 = vtos %v271
          %v273 = vmul.f32 %v260, %v247
          %v274 = vsel %vm235, %v273, 0.0
          %275 = vadd.xlane.f32.xlu0 %v274
          %v276 = vpop.xlane.xlu0 %275
          %v277 = vrot.slane %v276, 4
          %v278 = vadd.f32 %v276, %v277
          %v279 = vrot.slane %v278, 2
          %v280 = vadd.f32 %v278, %v279
          %v281 = vrot.slane %v280, 1
          %v282 = vadd.f32 %v280, %v281
          %s283 = vtos %v282
          %v284 = vstv %s283
          %v285 = vrcp.pop %v284
          %v286 = vmul.f32 %v284, %v285
          %v287 = vsub.f32 1.0, %v286
          %v288 = vmul.f32 %v285, %v287
          %v289 = vadd.f32 %v285, %v288
          %vm290 = vweird.f32 %v284
          %vm291 = vweird.f32 %v285
          %vm292 = vmor %vm290, %vm291
          %v293 = vsel %vm292, %v285, %v289
          %v294 = vand.u32 2147483647, %v284
          %vm295 = vcmp.eq.f32.partialorder %v294, 8.507059e+37
          %v296 = vand.u32 %v284, 2147483648
          %v297 = vor.u32 1.1754944e-38, %v296
          %v298 = vsel %vm295, %v297, %v293
          %s299 = vtos %v298
          %s300 = smul.f32 %s272, %s299
          %s301 = scalar_lea.smem [#allocation9], 0
          %302 = sst [smem:[%s301]] %s300
        $region44: #{tpu_custom_call.1} parent=27 // pred_fallthru
          _
        // Predicated region
        $region45: #{tpu_custom_call.1} parent=27 // pred_check
          %p303 = pneg %p85
        $region46: #{tpu_custom_call.1} parent=27 // pred_check_branch
          %305 = sbr.rel (%p303) target = $region48
        $region47: #{tpu_custom_call.1} parent=27 // pred_region
          %307 = vsyncadd [#allocation6], 0
          %s309 = sshll.u32 %s2, 4
          %s310 = int_to_ptr.hbm [resolvable:$true] %s309
          %312 = dma.smem_to_hbm [#allocation9], 16, %s310, [#allocation6]
        $region48: #{tpu_custom_call.1} parent=27 // pred_fallthru
          _
        // Predicated region
        $region49: #{tpu_custom_call.1} parent=27 // pred_check
          %p313 = pneg %p85
        $region50: #{tpu_custom_call.1} parent=27 // pred_check_branch
          %315 = sbr.rel (%p313) target = $region52
        $region51: #{tpu_custom_call.1} parent=27 // pred_region
          %317 = dma.done [#allocation6], 16
        $region52: #{tpu_custom_call.1} parent=27 // pred_fallthru
          _
        %318 = sfence
      $region28: #{tpu_custom_call.1} parent=5 // pred_fallthru
        _
      %p319 = scmp.le.s32.totalorder 2, %s15
      // Predicated region
      $region53: #{tpu_custom_call.1} parent=5 // pred_check
        %p320 = pneg %p319
      $region54: #{tpu_custom_call.1} parent=5 // pred_check_branch
        %322 = sbr.rel (%p320) target = $region56
      $region55: #{tpu_custom_call.1} parent=5 // pred_region
        %s323 = ssub.s32 %s15, 2
      $region56: #{tpu_custom_call.1} parent=5 // pred_fallthru
        _
    $region6: #{tpu_custom_call.1} parent=1 // loop_footer
      %s19 = sadd.s32 1, %s15
    $region7: #{tpu_custom_call.1} parent=1 // loop_footer_branch
      %14 = sbr.rel target = $region3
    $region8: #{tpu_custom_call.1} parent=1 // loop_exit
      _
    %324 = vsyncpa [#allocation5], 1
    %s325 = scalar_lea.sflag [#allocation5], 1
    %326 = vsyncpa %s325, 1
    %327 = vsyncpa [#allocation8], 1
    %s328 = scalar_lea.sflag [#allocation8], 1
    %329 = vsyncpa %s328, 1
    %330 = vsyncpa [#allocation6], 1
    %s331 = scalar_lea.sflag [#allocation6], 1
    %332 = vsyncpa %s331, 1

</llo_original>
